<compile_context>
chip_gen: v7x
topology: tpu7x:2x2x1
jax: 0.10.0
libtpu: 0.0.40
codegen_flags: <defaults>
</compile_context>

<pallas_src>
import functools
import math

import jax
import jax.numpy as jnp
from jax.experimental import pallas as pl
from jax.experimental.pallas import tpu as pltpu

C1, C2, C3 = 64, 128, 256      # per-point MLP channel widths
F1, F2 = 256, 128              # fc_1 / fc_2 output widths
# lane-aligned bias packing offsets: b1@0, b2@128, b3@256, bf1@512, bf2@768, bf3@896
_B1, _B2, _B3, _BF1, _BF2, _BF3 = 0, 128, 256, 512, 768, 896


def _round_up(x, m):
    return ((x + m - 1) // m) * m


def _fold_bn(w, b, gamma, beta, mean, var, eps=1e-5):
    """Fold eval-mode BatchNorm1d into the preceding conv1d(k=1)/linear."""
    scale = gamma / jnp.sqrt(var + eps)
    return w * scale[:, None], (b - mean) * scale + beta


def prepare_params(params, input_dim, output_dim, compute_dtype=jnp.float32):
    """One-time host-side prep (call once, reuse the result for every forward)."""
    f32 = jnp.float32
    cpad = _round_up(max(input_dim, 1), 8)
    d2 = output_dim * output_dim
    d2pad = _round_up(d2, 128)

    w1, b1 = _fold_bn(params["conv1_w"], params["conv1_b"], *params["bn1"])
    w2, b2 = _fold_bn(params["conv2_w"], params["conv2_b"], *params["bn2"])
    w3, b3 = _fold_bn(params["conv3_w"], params["conv3_b"], *params["bn3"])
    wf1, bf1 = _fold_bn(params["fc1_w"], params["fc1_b"], *params["bn4"])
    wf2, bf2 = _fold_bn(params["fc2_w"], params["fc2_b"], *params["bn5"])
    wf3, bf3 = params["fc3_w"], params["fc3_b"]

    # Per-point MLP weights in (K, N) layout; input channels zero-padded to cpad.
    w1_k = jnp.zeros((cpad, C1), f32).at[:input_dim, :].set(w1.T.astype(f32))
    w2_k = w2.T.astype(f32)                                   # (64, 128)
    w3_k = w3.T.astype(f32)                                   # (128, 256)

    # FC head packed into a single (256, 384 + d2pad) slab.
    wfc = jnp.zeros((F1, F1 + F2 + d2pad), f32)
    wfc = wfc.at[:, :F1].set(wf1.T.astype(f32))               # (256, 256)
    wfc = wfc.at[:, F1:F1 + F2].set(wf2.T.astype(f32))        # (256, 128)
    wfc = wfc.at[:F2, F1 + F2:F1 + F2 + d2].set(wf3.T.astype(f32))  # (128, d2)

    # All six bias rows packed into one lane-aligned (1, 896 + d2pad) row (f32).
    bias = jnp.zeros((1, _BF3 + d2pad), f32)
    bias = bias.at[0, _B1:_B1 + C1].set(b1.astype(f32))
    bias = bias.at[0, _B2:_B2 + C2].set(b2.astype(f32))
    bias = bias.at[0, _B3:_B3 + C3].set(b3.astype(f32))
    bias = bias.at[0, _BF1:_BF1 + F1].set(bf1.astype(f32))
    bias = bias.at[0, _BF2:_BF2 + F2].set(bf2.astype(f32))
    bf3_eye = bf3.astype(f32) + jnp.eye(output_dim, dtype=f32).reshape(-1)
    bias = bias.at[0, _BF3:_BF3 + d2].set(bf3_eye)            # eye(D) folded in

    return {
        "w1": w1_k.astype(compute_dtype),
        "w2": w2_k.astype(compute_dtype),
        "w3": w3_k.astype(compute_dtype),
        "wfc": wfc.astype(compute_dtype),
        "bias": bias,                                         # biases stay f32
    }


def _make_kernel(tn, n_points, d2pad):
    """Kernel body for grid = (batch, point_tiles)."""
    mask_tail = (n_points % tn) != 0

    def kernel(x_ref, w1_ref, w2_ref, w3_ref, wfc_ref, b_ref, out_ref, gmax_ref):
        nt = pl.program_id(1)
        cdt = w1_ref.dtype

        @pl.when(nt == 0)
        def _init():
            gmax_ref[...] = jnp.full_like(gmax_ref, -jnp.inf)

        # ---- shared per-point MLP on this tile of points (f32 accumulation)
        x = x_ref[...]                                           # (tn, cpad)
        h = jnp.dot(x, w1_ref[...], preferred_element_type=jnp.float32)
        h = jnp.maximum(h + b_ref[:, _B1:_B1 + C1], 0.0)         # (tn, 64)
        h = jnp.dot(h.astype(cdt), w2_ref[...], preferred_element_type=jnp.float32)
        h = jnp.maximum(h + b_ref[:, _B2:_B2 + C2], 0.0)         # (tn, 128)
        h = jnp.dot(h.astype(cdt), w3_ref[...], preferred_element_type=jnp.float32)
        h = jnp.maximum(h + b_ref[:, _B3:_B3 + C3], 0.0)         # (tn, 256)

        if mask_tail:
            # Out-of-range rows of the last tile hold undefined data -> mask.
            row = nt * tn + jax.lax.broadcasted_iota(jnp.int32, (tn, 1), 0)
            h = jnp.where(row < n_points, h, -jnp.inf)

        # ---- running global max-pool over points (per batch row)
        gmax_ref[...] = jnp.maximum(gmax_ref[...],
                                    jnp.max(h, axis=0, keepdims=True))

        # ---- FC head on the last point tile of this batch row
        @pl.when(nt == pl.num_programs(1) - 1)
        def _head():
            g = gmax_ref[...]                                    # (1, 256) f32
            f = jnp.dot(g.astype(cdt), wfc_ref[:, 0:F1],
                        preferred_element_type=jnp.float32)
            f = jnp.maximum(f + b_ref[:, _BF1:_BF1 + F1], 0.0)   # (1, 256)
            f = jnp.dot(f.astype(cdt), wfc_ref[:, F1:F1 + F2],
                        preferred_element_type=jnp.float32)
            f = jnp.maximum(f + b_ref[:, _BF2:_BF2 + F2], 0.0)   # (1, 128)
            o = jnp.dot(f.astype(cdt), wfc_ref[0:F2, F1 + F2:F1 + F2 + d2pad],
                        preferred_element_type=jnp.float32)
            out_ref[...] = o + b_ref[:, _BF3:_BF3 + d2pad]       # (1, d2pad)

    return kernel


@functools.partial(jax.jit, static_argnames=("output_dim", "block_points"))
def transformation_net_forward(x, prep, *, output_dim, block_points=1024):
    """x: (B, N, Cin) -> (B, D, D). `prep` comes from prepare_params (one-time)."""
    B, N, cin = x.shape
    cpad = prep["w1"].shape[0]
    cdt = prep["w1"].dtype
    d2 = output_dim * output_dim
    d2pad = prep["bias"].shape[1] - _BF3

    # Only per-call prep: tiny channel pad (Cin -> cpad, zeros) + dtype cast.
    if cin < cpad:
        x = jnp.pad(x, ((0, 0), (0, 0), (0, cpad - cin)))
    x = x.astype(cdt)

    tn = _round_up(min(block_points, _round_up(N, 8)), 8)
    n_tiles = pl.cdiv(N, tn)

    grid_spec = pltpu.PrefetchScalarGridSpec(
        num_scalar_prefetch=0,
        grid=(B, n_tiles),
        in_specs=[
            pl.BlockSpec((None, tn, cpad), lambda b, n: (b, n, 0)),   # x tile
            pl.BlockSpec((cpad, C1), lambda b, n: (0, 0)),            # w1
            pl.BlockSpec((C1, C2), lambda b, n: (0, 0)),              # w2
            pl.BlockSpec((C2, C3), lambda b, n: (0, 0)),              # w3
            pl.BlockSpec((F1, F1 + F2 + d2pad), lambda b, n: (0, 0)),  # fc slab
            pl.BlockSpec((1, _BF3 + d2pad), lambda b, n: (0, 0)),     # biases
        ],
        out_specs=pl.BlockSpec((None, 1, d2pad), lambda b, n: (b, 0, 0)),
        scratch_shapes=[pltpu.VMEM((1, C3), jnp.float32)],            # running max
    )

    out = pl.pallas_call(
        _make_kernel(tn, N, d2pad),
        out_shape=jax.ShapeDtypeStruct((B, 1, d2pad), jnp.float32),
        grid_spec=grid_spec,
        compiler_params=pltpu.CompilerParams(
            dimension_semantics=("parallel", "arbitrary")),
    )(x, prep["w1"], prep["w2"], prep["w3"], prep["wfc"], prep["bias"])

    return out.reshape(B, d2pad)[:, :d2].reshape(B, output_dim, output_dim)


def transformation_net_reference(x, params, output_dim, eps=1e-5):
    """Pure-JAX reference matching the PyTorch forward (eval-mode BN)."""
    def bn(h, stats):
        gamma, beta, mean, var = stats
        return (h - mean) / jnp.sqrt(var + eps) * gamma + beta

    h = jax.nn.relu(bn(x @ params["conv1_w"].T + params["conv1_b"], params["bn1"]))
    h = jax.nn.relu(bn(h @ params["conv2_w"].T + params["conv2_b"], params["bn2"]))
    h = jax.nn.relu(bn(h @ params["conv3_w"].T + params["conv3_b"], params["bn3"]))
    g = jnp.max(h, axis=1)
    f = jax.nn.relu(bn(g @ params["fc1_w"].T + params["fc1_b"], params["bn4"]))
    f = jax.nn.relu(bn(f @ params["fc2_w"].T + params["fc2_b"], params["bn5"]))
    o = f @ params["fc3_w"].T + params["fc3_b"]
    return o.reshape(-1, output_dim, output_dim) + jnp.eye(output_dim, dtype=o.dtype)


if __name__ == "__main__":
    INPUT_DIM, OUTPUT_DIM = 3, 3
    B, N = 2, 16

    ks = jax.random.split(jax.random.PRNGKey(0), 19)

    def uniform(k, shape, fan_in):
        bound = 1.0 / math.sqrt(fan_in)
        return jax.random.uniform(k, shape, jnp.float32, -bound, bound)

    def bn_stats(k, c):
        k1, k2, k3, k4 = jax.random.split(k, 4)
        return (jax.random.uniform(k1, (c,), jnp.float32, 0.5, 1.5),
                0.1 * jax.random.normal(k2, (c,), jnp.float32),
                0.1 * jax.random.normal(k3, (c,), jnp.float32),
                jax.random.uniform(k4, (c,), jnp.float32, 0.5, 1.5))

    x = jax.random.normal(ks[0], (B, N, INPUT_DIM), jnp.float32)
    params = {
        "conv1_w": uniform(ks[1], (64, INPUT_DIM), INPUT_DIM),
        "conv1_b": uniform(ks[2], (64,), INPUT_DIM),
        "conv2_w": uniform(ks[3], (128, 64), 64),
        "conv2_b": uniform(ks[4], (128,), 64),
        "conv3_w": uniform(ks[5], (256, 128), 128),
        "conv3_b": uniform(ks[6], (256,), 128),
        "fc1_w": uniform(ks[7], (256, 256), 256),
        "fc1_b": uniform(ks[8], (256,), 256),
        "fc2_w": uniform(ks[9], (128, 256), 256),
        "fc2_b": uniform(ks[10], (128,), 256),
        "fc3_w": uniform(ks[11], (OUTPUT_DIM * OUTPUT_DIM, 128), 128),
        "fc3_b": uniform(ks[12], (OUTPUT_DIM * OUTPUT_DIM,), 128),
        "bn1": bn_stats(ks[13], 64),
        "bn2": bn_stats(ks[14], 128),
        "bn3": bn_stats(ks[15], 256),
        "bn4": bn_stats(ks[16], 256),
        "bn5": bn_stats(ks[17], 128),
    }

    ref = transformation_net_reference(x, params, OUTPUT_DIM)

    # f32 path (bit-accurate check)
    prep_f32 = prepare_params(params, INPUT_DIM, OUTPUT_DIM, jnp.float32)
    out_f32 = jax.block_until_ready(
        transformation_net_forward(x, prep_f32, output_dim=OUTPUT_DIM))
    assert out_f32.shape == (B, OUTPUT_DIM, OUTPUT_DIM), out_f32.shape
    err_f32 = float(jnp.max(jnp.abs(out_f32 - ref)))
    assert err_f32 < 1e-3, err_f32

    # bf16 MXU path (v6e/v7x-friendly): bf16 operands, f32 accumulation & VPU math
    prep_bf16 = prepare_params(params, INPUT_DIM, OUTPUT_DIM, jnp.bfloat16)
    out_bf16 = jax.block_until_ready(
        transformation_net_forward(x, prep_bf16, output_dim=OUTPUT_DIM))
    err_bf16 = float(jnp.max(jnp.abs(out_bf16 - ref)))
    assert err_bf16 < 1e-1, err_bf16

    print("KERNEL_OK")
</pallas_src>

<mosaic_0001>
module attributes {stable_mosaic.version = 11 : i64} {
  func.func @kernel(%arg0: i32, %arg1: i32, %arg2: memref<1x16x8xf32, #tpu.memory_space<vmem>>, %arg3: memref<8x64xf32, #tpu.memory_space<vmem>>, %arg4: memref<64x128xf32, #tpu.memory_space<vmem>>, %arg5: memref<128x256xf32, #tpu.memory_space<vmem>>, %arg6: memref<256x512xf32, #tpu.memory_space<vmem>>, %arg7: memref<1x1024xf32, #tpu.memory_space<vmem>>, %arg8: memref<1x1x128xf32, #tpu.memory_space<vmem>>, %arg9: memref<1x256xf32, #tpu.memory_space<vmem>>) attributes {dimension_semantics = [#tpu.dimension_semantics<parallel>, #tpu.dimension_semantics<arbitrary>], iteration_bounds = array<i64: 2, 1>, scalar_prefetch = 0 : i64, scratch_operands = 1 : i64, tpu.core_type = #tpu.core_type<tc>, window_params = [{transform_indices = @transform_0, window_bounds = array<i64: 1, 16, 8>}, {pipeline_mode = #tpu.pipeline_mode<synchronous>, transform_indices = @transform_1, window_bounds = array<i64: 8, 64>}, {pipeline_mode = #tpu.pipeline_mode<synchronous>, transform_indices = @transform_2, window_bounds = array<i64: 64, 128>}, {pipeline_mode = #tpu.pipeline_mode<synchronous>, transform_indices = @transform_3, window_bounds = array<i64: 128, 256>}, {pipeline_mode = #tpu.pipeline_mode<synchronous>, transform_indices = @transform_4, window_bounds = array<i64: 256, 512>}, {pipeline_mode = #tpu.pipeline_mode<synchronous>, transform_indices = @transform_5, window_bounds = array<i64: 1, 1024>}, {transform_indices = @transform_6, window_bounds = array<i64: 1, 1, 128>}]} {
    %c0_i32 = arith.constant 0 : i32
    %0 = arith.cmpi eq, %arg1, %c0_i32 : i32
    %1 = arith.extui %0 : i1 to i32
    %c0_i32_0 = arith.constant 0 : i32
    %2 = arith.cmpi ne, %1, %c0_i32_0 : i32
    scf.if %2 {
      %cst_25 = arith.constant 0xFF800000 : f32
      %34 = vector.broadcast %cst_25 : f32 to vector<1x256xf32>
      %c0_26 = arith.constant 0 : index
      %c0_27 = arith.constant 0 : index
      %35 = vector.load %arg9[%c0_26, %c0_27] : memref<1x256xf32, #tpu.memory_space<vmem>>, vector<1x256xf32>
      tpu.vector_store %arg9[%c0_26, %c0_27], %34 {strides = array<i32>} : memref<1x256xf32, #tpu.memory_space<vmem>>, vector<1x256xf32>,
    } else {
    }
    %c0 = arith.constant 0 : index
    %c0_1 = arith.constant 0 : index
    %c0_2 = arith.constant 0 : index
    %3 = vector.load %arg2[%c0, %c0_1, %c0_2] : memref<1x16x8xf32, #tpu.memory_space<vmem>>, vector<1x16x8xf32>
    %4 = vector.shape_cast %3 : vector<1x16x8xf32> to vector<16x8xf32>
    %c0_3 = arith.constant 0 : index
    %c0_4 = arith.constant 0 : index
    %5 = vector.load %arg3[%c0_3, %c0_4] : memref<8x64xf32, #tpu.memory_space<vmem>>, vector<8x64xf32>
    %cst = arith.constant dense<0.000000e+00> : vector<16x64xf32>
    %6 = tpu.matmul %4, %5, %cst {dimension_numbers = #tpu.dot_dimension_numbers<[1], [0], [0], [1], [0, 0, 1, 1], [], []>} : vector<16x8xf32>, vector<8x64xf32>, vector<16x64xf32> -> vector<16x64xf32>
    %c0_5 = arith.constant 0 : index
    %c0_6 = arith.constant 0 : index
    %7 = vector.load %arg7[%c0_5, %c0_6] : memref<1x1024xf32, #tpu.memory_space<vmem>>, vector<1x64xf32>
    %8 = vector.broadcast %7 : vector<1x64xf32> to vector<16x64xf32>
    %9 = arith.addf %6, %8 : vector<16x64xf32>
    %cst_7 = arith.constant 0.000000e+00 : f32
    %10 = vector.broadcast %cst_7 : f32 to vector<16x64xf32>
    %11 = arith.maximumf %9, %10 : vector<16x64xf32>
    %c0_8 = arith.constant 0 : index
    %c0_9 = arith.constant 0 : index
    %12 = vector.load %arg4[%c0_8, %c0_9] : memref<64x128xf32, #tpu.memory_space<vmem>>, vector<64x128xf32>
    %cst_10 = arith.constant dense<0.000000e+00> : vector<16x128xf32>
    %13 = tpu.matmul %11, %12, %cst_10 {dimension_numbers = #tpu.dot_dimension_numbers<[1], [0], [0], [1], [0, 0, 1, 1], [], []>} : vector<16x64xf32>, vector<64x128xf32>, vector<16x128xf32> -> vector<16x128xf32>
    %c0_11 = arith.constant 0 : index
    %c128 = arith.constant 128 : index
    %14 = vector.load %arg7[%c0_11, %c128] : memref<1x1024xf32, #tpu.memory_space<vmem>>, vector<1x128xf32>
    %15 = vector.broadcast %14 : vector<1x128xf32> to vector<16x128xf32>
    %16 = arith.addf %13, %15 : vector<16x128xf32>
    %cst_12 = arith.constant 0.000000e+00 : f32
    %17 = vector.broadcast %cst_12 : f32 to vector<16x128xf32>
    %18 = arith.maximumf %16, %17 : vector<16x128xf32>
    %c0_13 = arith.constant 0 : index
    %c0_14 = arith.constant 0 : index
    %19 = vector.load %arg5[%c0_13, %c0_14] : memref<128x256xf32, #tpu.memory_space<vmem>>, vector<128x256xf32>
    %cst_15 = arith.constant dense<0.000000e+00> : vector<16x256xf32>
    %20 = tpu.matmul %18, %19, %cst_15 {dimension_numbers = #tpu.dot_dimension_numbers<[1], [0], [0], [1], [0, 0, 1, 1], [], []>} : vector<16x128xf32>, vector<128x256xf32>, vector<16x256xf32> -> vector<16x256xf32>
    %c0_16 = arith.constant 0 : index
    %c256 = arith.constant 256 : index
    %21 = vector.load %arg7[%c0_16, %c256] : memref<1x1024xf32, #tpu.memory_space<vmem>>, vector<1x256xf32>
    %22 = vector.broadcast %21 : vector<1x256xf32> to vector<16x256xf32>
    %23 = arith.addf %20, %22 : vector<16x256xf32>
    %cst_17 = arith.constant 0.000000e+00 : f32
    %24 = vector.broadcast %cst_17 : f32 to vector<16x256xf32>
    %25 = arith.maximumf %23, %24 : vector<16x256xf32>
    %c0_18 = arith.constant 0 : index
    %c0_19 = arith.constant 0 : index
    %26 = vector.load %arg9[%c0_18, %c0_19] : memref<1x256xf32, #tpu.memory_space<vmem>>, vector<1x256xf32>
    %cst_20 = arith.constant dense<0xFF800000> : vector<256xf32>
    %27 = vector.multi_reduction <maximumf>, %25, %cst_20 [0] : vector<16x256xf32> to vector<256xf32>
    %28 = vector.shape_cast %27 : vector<256xf32> to vector<1x256xf32>
    %29 = arith.maximumf %26, %28 : vector<1x256xf32>
    %c0_21 = arith.constant 0 : index
    %c0_22 = arith.constant 0 : index
    %30 = vector.load %arg9[%c0_21, %c0_22] : memref<1x256xf32, #tpu.memory_space<vmem>>, vector<1x256xf32>
    tpu.vector_store %arg9[%c0_21, %c0_22], %29 {strides = array<i32>} : memref<1x256xf32, #tpu.memory_space<vmem>>, vector<1x256xf32>,
    %c0_i32_23 = arith.constant 0 : i32
    %31 = arith.cmpi eq, %arg1, %c0_i32_23 : i32
    %32 = arith.extui %31 : i1 to i32
    %c0_i32_24 = arith.constant 0 : i32
    %33 = arith.cmpi ne, %32, %c0_i32_24 : i32
    scf.if %33 {
      %c0_25 = arith.constant 0 : index
      %c0_26 = arith.constant 0 : index
      %34 = vector.load %arg9[%c0_25, %c0_26] : memref<1x256xf32, #tpu.memory_space<vmem>>, vector<1x256xf32>
      %c0_27 = arith.constant 0 : index
      %c0_28 = arith.constant 0 : index
      %35 = vector.load %arg6[%c0_27, %c0_28] : memref<256x512xf32, #tpu.memory_space<vmem>>, vector<256x256xf32>
      %cst_29 = arith.constant dense<0.000000e+00> : vector<1x256xf32>
      %36 = tpu.matmul %34, %35, %cst_29 {dimension_numbers = #tpu.dot_dimension_numbers<[1], [0], [0], [1], [0, 0, 1, 1], [], []>} : vector<1x256xf32>, vector<256x256xf32>, vector<1x256xf32> -> vector<1x256xf32>
      %c0_30 = arith.constant 0 : index
      %c512 = arith.constant 512 : index
      %37 = vector.load %arg7[%c0_30, %c512] : memref<1x1024xf32, #tpu.memory_space<vmem>>, vector<1x256xf32>
      %38 = arith.addf %36, %37 : vector<1x256xf32>
      %cst_31 = arith.constant 0.000000e+00 : f32
      %39 = vector.broadcast %cst_31 : f32 to vector<1x256xf32>
      %40 = arith.maximumf %38, %39 : vector<1x256xf32>
      %c0_32 = arith.constant 0 : index
      %c256_33 = arith.constant 256 : index
      %41 = vector.load %arg6[%c0_32, %c256_33] : memref<256x512xf32, #tpu.memory_space<vmem>>, vector<256x128xf32>
      %cst_34 = arith.constant dense<0.000000e+00> : vector<1x128xf32>
      %42 = tpu.matmul %40, %41, %cst_34 {dimension_numbers = #tpu.dot_dimension_numbers<[1], [0], [0], [1], [0, 0, 1, 1], [], []>} : vector<1x256xf32>, vector<256x128xf32>, vector<1x128xf32> -> vector<1x128xf32>
      %c0_35 = arith.constant 0 : index
      %c768 = arith.constant 768 : index
      %43 = vector.load %arg7[%c0_35, %c768] : memref<1x1024xf32, #tpu.memory_space<vmem>>, vector<1x128xf32>
      %44 = arith.addf %42, %43 : vector<1x128xf32>
      %cst_36 = arith.constant 0.000000e+00 : f32
      %45 = vector.broadcast %cst_36 : f32 to vector<1x128xf32>
      %46 = arith.maximumf %44, %45 : vector<1x128xf32>
      %c0_37 = arith.constant 0 : index
      %c384 = arith.constant 384 : index
      %47 = vector.load %arg6[%c0_37, %c384] : memref<256x512xf32, #tpu.memory_space<vmem>>, vector<128x128xf32>
      %cst_38 = arith.constant dense<0.000000e+00> : vector<1x128xf32>
      %48 = tpu.matmul %46, %47, %cst_38 {dimension_numbers = #tpu.dot_dimension_numbers<[1], [0], [0], [1], [0, 0, 1, 1], [], []>} : vector<1x128xf32>, vector<128x128xf32>, vector<1x128xf32> -> vector<1x128xf32>
      %c0_39 = arith.constant 0 : index
      %c896 = arith.constant 896 : index
      %49 = vector.load %arg7[%c0_39, %c896] : memref<1x1024xf32, #tpu.memory_space<vmem>>, vector<1x128xf32>
      %50 = arith.addf %48, %49 : vector<1x128xf32>
      %c0_40 = arith.constant 0 : index
      %c0_41 = arith.constant 0 : index
      %c0_42 = arith.constant 0 : index
      %51 = vector.load %arg8[%c0_40, %c0_41, %c0_42] : memref<1x1x128xf32, #tpu.memory_space<vmem>>, vector<1x1x128xf32>
      %52 = vector.shape_cast %51 : vector<1x1x128xf32> to vector<1x128xf32>
      %53 = vector.shape_cast %50 : vector<1x128xf32> to vector<1x1x128xf32>
      tpu.vector_store %arg8[%c0_40, %c0_41, %c0_42], %53 {strides = array<i32>} : memref<1x1x128xf32, #tpu.memory_space<vmem>>, vector<1x1x128xf32>,
    } else {
    }
    return
  }
  func.func @transform_0(%arg0: i32, %arg1: i32) -> (i32, i32, i32) {
    %c0_i32 = arith.constant 0 : i32
    %c0_i32_0 = arith.constant 0 : i32
    return %arg0, %arg1, %c0_i32 : i32, i32, i32
  }
  func.func @transform_1(%arg0: i32, %arg1: i32) -> (i32, i32) {
    %c0_i32 = arith.constant 0 : i32
    %c0_i32_0 = arith.constant 0 : i32
    %c0_i32_1 = arith.constant 0 : i32
    return %c0_i32, %c0_i32_0 : i32, i32
  }
  func.func @transform_2(%arg0: i32, %arg1: i32) -> (i32, i32) {
    %c0_i32 = arith.constant 0 : i32
    %c0_i32_0 = arith.constant 0 : i32
    %c0_i32_1 = arith.constant 0 : i32
    return %c0_i32, %c0_i32_0 : i32, i32
  }
  func.func @transform_3(%arg0: i32, %arg1: i32) -> (i32, i32) {
    %c0_i32 = arith.constant 0 : i32
    %c0_i32_0 = arith.constant 0 : i32
    %c0_i32_1 = arith.constant 0 : i32
    return %c0_i32, %c0_i32_0 : i32, i32
  }
  func.func @transform_4(%arg0: i32, %arg1: i32) -> (i32, i32) {
    %c0_i32 = arith.constant 0 : i32
    %c0_i32_0 = arith.constant 0 : i32
    %c0_i32_1 = arith.constant 0 : i32
    return %c0_i32, %c0_i32_0 : i32, i32
  }
  func.func @transform_5(%arg0: i32, %arg1: i32) -> (i32, i32) {
    %c0_i32 = arith.constant 0 : i32
    %c0_i32_0 = arith.constant 0 : i32
    %c0_i32_1 = arith.constant 0 : i32
    return %c0_i32, %c0_i32_0 : i32, i32
  }
  func.func @transform_6(%arg0: i32, %arg1: i32) -> (i32, i32, i32) {
    %c0_i32 = arith.constant 0 : i32
    %c0_i32_0 = arith.constant 0 : i32
    %c0_i32_1 = arith.constant 0 : i32
    return %arg0, %c0_i32, %c0_i32_0 : i32, i32, i32
  }
}

</mosaic_0001>

<llo_original>
// kernel: transformation_net_forward.1
$region0: #{transformation_net_forward.1}
  #allocation0 [shape = 'u32[]', space=smem, size = 0x4, offset = 0x4, fixed_abs, tag = 'smem constant byte address 0x4 - core index']
  #allocation1 [shape = 'u32[144,128]{1,0:T(1,128)}', space=vmem, size = 0x12000, scoped, tag = 'internal scratch']
  #allocation2 [shape = 'f32[1,256]{1,0:T(1,128)}', space=vmem, size = 0x400, scoped, tag = 'scratch operand']
  %s0 = inlined_call_operand.vmem [shape: f32[2,16,8], index: 0, kind: input, shape index: {}]
  %s1 = inlined_call_operand.vmem [shape: f32[8,64], index: 1, kind: input, shape index: {}]
  %s2 = inlined_call_operand.vmem [shape: f32[64,128], index: 2, kind: input, shape index: {}]
  %s3 = inlined_call_operand.hbm [shape: f32[128,256], index: 3, kind: input, shape index: {}]
  %s4 = inlined_call_operand.hbm [shape: f32[256,512], index: 4, kind: input, shape index: {}]
  %s5 = inlined_call_operand.vmem [shape: f32[1,1024], index: 5, kind: input, shape index: {}]
  %s6 = inlined_call_operand.vmem [shape: f32[2,1,128], index: 6, kind: output, shape index: {}]
  %s7 = sld [smem:[#allocation0]]
  $region73: #{transformation_net_forward.1} parent=0
    _
  %s9 = ssub.s32 1, %s7
  %s10 = scalar_select 0, %s9, %s7
  $region1: #{transformation_net_forward.1} parent=0
    #allocation3 [shape = 'u8[131072]{0}', space=vmem, size = 0x20000, scoped, tag = 'input window, operand 3, single buffered']
    #allocation4 [shape = 's32[2]{0}', space=sflag, size = 0x8, scoped, tag = 'scoped memory for transformation_net_forward.1']
    #allocation5 [shape = 'u8[524288]{0}', space=vmem, size = 0x80000, scoped, tag = 'input window, operand 4, single buffered']
    #allocation6 [shape = 's32[1]{0}', space=sflag, size = 0x4, scoped, tag = 'scoped memory for transformation_net_forward.1']
    %11 = vsyncpa [#allocation4], 0
    %12 = vsyncpa [#allocation6], 0
    loop: start=0, step=1, limit=4
    $region2: #{transformation_net_forward.1} parent=1 // loop_pre_header
      _
    $region3: #{transformation_net_forward.1} parent=1 // loop_header
      %s14 = sphi 0, %s18
      %p15 = scmp.ge.s32.totalorder %s14, 4
      %s21 = sphi 0, %s33
      %s22 = sphi 0, %s29
      %s23 = sphi 0, %s21
      %s24 = sphi 0, %s22
      %s25 = sphi 0, %s23
      %s26 = sphi 0, %s24
      %s38 = sphi 0, %s40
      %s41 = sphi 0, %s38
      %s42 = sphi 0, %s41
      %s58 = sphi 0, %s42
      %s62 = sphi 0, %s62
      %s64 = sphi 0, %s62
      %s65 = sphi 0, %s64
      %s79 = sphi 0, %s65
      %s83 = sphi 0, %s83
      %s85 = sphi 0, %s83
      %s86 = sphi 0, %s85
      %s100 = sphi 0, %s86
      %s104 = sphi 0, %s104
      %s106 = sphi 0, %s104
      %s107 = sphi 0, %s106
      %s121 = sphi 0, %s107
      %s125 = sphi 0, %s125
      %s127 = sphi 0, %s125
      %s128 = sphi 0, %s127
      %s142 = sphi 0, %s128
      %s146 = sphi 0, %s146
      %s148 = sphi 0, %s146
      %s149 = sphi 0, %s148
      %s163 = sphi 0, %s149
      %s169 = sphi 0, %s171
      %s172 = sphi 0, %s169
      %s173 = sphi 0, %s172
      %s189 = sphi 0, %s173
    $region4: #{transformation_net_forward.1} parent=1 // loop_header_branch
      %17 = sbr.rel (%p15) target = $region8
    $region5: #{transformation_net_forward.1} parent=1 // loop_body
      %s19 = ssub.s32 %s14, 1
      %s20 = ssub.s32 %s14, 2
      %s27 = sadd.s32 1, %s22
      %p28 = scmp.ge.s32.totalorder %s27, 1
      %s29 = scalar_select %p28, 0, %s27
      %s30 = sadd.s32 1, %s21
      %s31 = scalar_select %p28, %s30, %s21
      %p32 = scmp.ge.s32.totalorder %s31, 2
      %s33 = scalar_select %p32, 0, %s31
      %s34 = ssub.s32 %s21, %s33
      %s35 = ssub.s32 %s22, %s29
      %s36 = sor.u32 %s34, %s35
      %p37 = scmp.eq.s32.totalorder %s36, 0
      %s39 = sadd.s32 %s38, 1
      %s40 = scalar_select %p37, %s38, %s39
      %p43 = pneg %p37
      %p44 = scmp.eq.s32.totalorder %s14, 1
      %p45 = por %p43, %p44
      %p46 = scmp.ne.s32.totalorder %s38, %s41
      %p47 = scmp.eq.s32.totalorder %s14, 0
      %p48 = por %p46, %p47
      %p49 = scmp.ne.s32.totalorder %s38, %s41
      %p50 = scmp.eq.s32.totalorder %s19, 1
      %p51 = por %p49, %p50
      %p52 = scmp.ne.s32.totalorder %s41, %s42
      %p53 = scmp.eq.s32.totalorder %s19, 0
      %p54 = por %p52, %p53
      %p55 = scmp.ne.s32.totalorder %s41, %s42
      %p56 = scmp.eq.s32.totalorder %s20, 1
      %p57 = por %p55, %p56
      %p59 = scmp.ne.s32.totalorder %s42, %s58
      %p60 = scmp.eq.s32.totalorder %s20, 0
      %p61 = por %p59, %p60
      %s63 = sadd.s32 %s62, 1
      %p66 = scmp.eq.s32.totalorder %s14, 1
      %p67 = scmp.ne.s32.totalorder %s62, %s64
      %p68 = scmp.eq.s32.totalorder %s14, 0
      %p69 = por %p67, %p68
      %p70 = scmp.ne.s32.totalorder %s62, %s64
      %p71 = scmp.eq.s32.totalorder %s19, 1
      %p72 = por %p70, %p71
      %p73 = scmp.ne.s32.totalorder %s64, %s65
      %p74 = scmp.eq.s32.totalorder %s19, 0
      %p75 = por %p73, %p74
      %p76 = scmp.ne.s32.totalorder %s64, %s65
      %p77 = scmp.eq.s32.totalorder %s20, 1
      %p78 = por %p76, %p77
      %p80 = scmp.ne.s32.totalorder %s65, %s79
      %p81 = scmp.eq.s32.totalorder %s20, 0
      %p82 = por %p80, %p81
      %s84 = sadd.s32 %s83, 1
      %p87 = scmp.eq.s32.totalorder %s14, 1
      %p88 = scmp.ne.s32.totalorder %s83, %s85
      %p89 = scmp.eq.s32.totalorder %s14, 0
      %p90 = por %p88, %p89
      %p91 = scmp.ne.s32.totalorder %s83, %s85
      %p92 = scmp.eq.s32.totalorder %s19, 1
      %p93 = por %p91, %p92
      %p94 = scmp.ne.s32.totalorder %s85, %s86
      %p95 = scmp.eq.s32.totalorder %s19, 0
      %p96 = por %p94, %p95
      %p97 = scmp.ne.s32.totalorder %s85, %s86
      %p98 = scmp.eq.s32.totalorder %s20, 1
      %p99 = por %p97, %p98
      %p101 = scmp.ne.s32.totalorder %s86, %s100
      %p102 = scmp.eq.s32.totalorder %s20, 0
      %p103 = por %p101, %p102
      %s105 = sadd.s32 %s104, 1
      %p108 = scmp.eq.s32.totalorder %s14, 1
      %p109 = scmp.ne.s32.totalorder %s104, %s106
      %p110 = scmp.eq.s32.totalorder %s14, 0
      %p111 = por %p109, %p110
      %p112 = scmp.ne.s32.totalorder %s104, %s106
      %p113 = scmp.eq.s32.totalorder %s19, 1
      %p114 = por %p112, %p113
      %p115 = scmp.ne.s32.totalorder %s106, %s107
      %p116 = scmp.eq.s32.totalorder %s19, 0
      %p117 = por %p115, %p116
      %p118 = scmp.ne.s32.totalorder %s106, %s107
      %p119 = scmp.eq.s32.totalorder %s20, 1
      %p120 = por %p118, %p119
      %p122 = scmp.ne.s32.totalorder %s107, %s121
      %p123 = scmp.eq.s32.totalorder %s20, 0
      %p124 = por %p122, %p123
      %s126 = sadd.s32 %s125, 1
      %p129 = scmp.eq.s32.totalorder %s14, 1
      %p130 = scmp.ne.s32.totalorder %s125, %s127
      %p131 = scmp.eq.s32.totalorder %s14, 0
      %p132 = por %p130, %p131
      %p133 = scmp.ne.s32.totalorder %s125, %s127
      %p134 = scmp.eq.s32.totalorder %s19, 1
      %p135 = por %p133, %p134
      %p136 = scmp.ne.s32.totalorder %s127, %s128
      %p137 = scmp.eq.s32.totalorder %s19, 0
      %p138 = por %p136, %p137
      %p139 = scmp.ne.s32.totalorder %s127, %s128
      %p140 = scmp.eq.s32.totalorder %s20, 1
      %p141 = por %p139, %p140
      %p143 = scmp.ne.s32.totalorder %s128, %s142
      %p144 = scmp.eq.s32.totalorder %s20, 0
      %p145 = por %p143, %p144
      %s147 = sadd.s32 %s146, 1
      %p150 = scmp.eq.s32.totalorder %s14, 1
      %p151 = scmp.ne.s32.totalorder %s146, %s148
      %p152 = scmp.eq.s32.totalorder %s14, 0
      %p153 = por %p151, %p152
      %p154 = scmp.ne.s32.totalorder %s146, %s148
      %p155 = scmp.eq.s32.totalorder %s19, 1
      %p156 = por %p154, %p155
      %p157 = scmp.ne.s32.totalorder %s148, %s149
      %p158 = scmp.eq.s32.totalorder %s19, 0
      %p159 = por %p157, %p158
      %p160 = scmp.ne.s32.totalorder %s148, %s149
      %p161 = scmp.eq.s32.totalorder %s20, 1
      %p162 = por %p160, %p161
      %p164 = scmp.ne.s32.totalorder %s149, %s163
      %p165 = scmp.eq.s32.totalorder %s20, 0
      %p166 = por %p164, %p165
      %s167 = ssub.s32 %s21, %s33
      %p168 = scmp.eq.s32.totalorder %s167, 0
      %s170 = sadd.s32 %s169, 1
      %s171 = scalar_select %p168, %s169, %s170
      %p174 = pneg %p168
      %p175 = scmp.eq.s32.totalorder %s14, 1
      %p176 = por %p174, %p175
      %p177 = scmp.ne.s32.totalorder %s169, %s172
      %p178 = scmp.eq.s32.totalorder %s14, 0
      %p179 = por %p177, %p178
      %p180 = scmp.ne.s32.totalorder %s169, %s172
      %p181 = scmp.eq.s32.totalorder %s19, 1
      %p182 = por %p180, %p181
      %p183 = scmp.ne.s32.totalorder %s172, %s173
      %p184 = scmp.eq.s32.totalorder %s19, 0
      %p185 = por %p183, %p184
      %p186 = scmp.ne.s32.totalorder %s172, %s173
      %p187 = scmp.eq.s32.totalorder %s20, 1
      %p188 = por %p186, %p187
      %p190 = scmp.ne.s32.totalorder %s173, %s189
      %p191 = scmp.eq.s32.totalorder %s20, 0
      %p192 = por %p190, %p191
      %p193 = scmp.le.s32.totalorder 1, %s14
      %p194 = scmp.lt.s32.totalorder %s14, 3
      %p195 = pnand %p193, %p194
      %p196 = pneg %p195
      // Predicated region
      $region9: #{transformation_net_forward.1} parent=5 // pred_check
        _
      $region10: #{transformation_net_forward.1} parent=5 // pred_check_branch
        %198 = sbr.rel (%p195) target = $region12
      $region11: #{transformation_net_forward.1} parent=5 // pred_region
        %s199 = ssub.s32 %s14, 1
        // Predicated region
        $region13: #{transformation_net_forward.1} parent=11 // pred_check
          %p200 = pneg %p75
        $region14: #{transformation_net_forward.1} parent=11 // pred_check_branch
          %202 = sbr.rel (%p200) target = $region16
        $region15: #{transformation_net_forward.1} parent=11 // pred_region
          _
        $region16: #{transformation_net_forward.1} parent=11 // pred_fallthru
          _
        // Predicated region
        $region17: #{transformation_net_forward.1} parent=11 // pred_check
          %p203 = pneg %p96
        $region18: #{transformation_net_forward.1} parent=11 // pred_check_branch
          %205 = sbr.rel (%p203) target = $region20
        $region19: #{transformation_net_forward.1} parent=11 // pred_region
          _
        $region20: #{transformation_net_forward.1} parent=11 // pred_fallthru
          _
        // Predicated region
        $region21: #{transformation_net_forward.1} parent=11 // pred_check
          %p206 = pneg %p117
        $region22: #{transformation_net_forward.1} parent=11 // pred_check_branch
          %208 = sbr.rel (%p206) target = $region24
        $region23: #{transformation_net_forward.1} parent=11 // pred_region
          %s210 = ssub.s32 4096, 4096
          %211 = vsyncadd [#allocation4], %s210
          %s212 = sshll.u32 [#allocation3], 4
          %s213 = int_to_ptr.vmem [resolvable:$true] %s212
          %218 = dma.hbm_to_vmem [thread:$0]  %s3, 4096, %s213, [#allocation4], 256, 256, 16
        $region24: #{transformation_net_forward.1} parent=11 // pred_fallthru
          _
        // Predicated region
        $region25: #{transformation_net_forward.1} parent=11 // pred_check
          %p219 = pneg %p138
        $region26: #{transformation_net_forward.1} parent=11 // pred_check_branch
          %221 = sbr.rel (%p219) target = $region28
        $region27: #{transformation_net_forward.1} parent=11 // pred_region
          %s223 = ssub.s32 16384, 16384
          %224 = vsyncadd [#allocation6], %s223
          %s225 = sshll.u32 [#allocation5], 4
          %s226 = int_to_ptr.vmem [resolvable:$true] %s225
          %231 = dma.hbm_to_vmem [thread:$0]  %s4, 16384, %s226, [#allocation6], 512, 512, 32
        $region28: #{transformation_net_forward.1} parent=11 // pred_fallthru
          _
        // Predicated region
        $region29: #{transformation_net_forward.1} parent=11 // pred_check
          %p232 = pneg %p159
        $region30: #{transformation_net_forward.1} parent=11 // pred_check_branch
          %234 = sbr.rel (%p232) target = $region32
        $region31: #{transformation_net_forward.1} parent=11 // pred_region
          _
        $region32: #{transformation_net_forward.1} parent=11 // pred_fallthru
          _
      $region12: #{transformation_net_forward.1} parent=5 // pred_fallthru
        _
      %p235 = scmp.lt.s32.totalorder %s14, 2
      // Predicated region
      $region33: #{transformation_net_forward.1} parent=5 // pred_check
        %p236 = pneg %p235
      $region34: #{transformation_net_forward.1} parent=5 // pred_check_branch
        %238 = sbr.rel (%p236) target = $region36
      $region35: #{transformation_net_forward.1} parent=5 // pred_region
        // Predicated region
        $region37: #{transformation_net_forward.1} parent=35 // pred_check
          %p239 = pneg %p48
        $region38: #{transformation_net_forward.1} parent=35 // pred_check_branch
          %241 = sbr.rel (%p239) target = $region40
        $region39: #{transformation_net_forward.1} parent=35 // pred_region
          %s242 = smul.u32 2, %s22
          %p243 = scmp.lt.s32.totalorder %s21, 1
          %s244 = scalar_select %p243, %s21, 1
          %p245 = scmp.lt.s32.totalorder %s242, 1
          %s246 = scalar_select %p245, %s242, 1
          %s247 = smul.addr %s244, 2
          %s248 = sadd.s32 %s246, %s247
          %s249 = smul.addr %s248, 8
          %s250 = scalar_lea.vmem %s0, %s249
          %s251 = smul.u32 2, %s22
        $region40: #{transformation_net_forward.1} parent=35 // pred_fallthru
          _
      $region36: #{transformation_net_forward.1} parent=5 // pred_fallthru
        _
      %p252 = scmp.le.s32.totalorder 1, %s14
      %p253 = scmp.lt.s32.totalorder %s14, 3
      %p254 = pnand %p252, %p253
      %p255 = pneg %p254
      // Predicated region
      $region41: #{transformation_net_forward.1} parent=5 // pred_check
        _
      $region42: #{transformation_net_forward.1} parent=5 // pred_check_branch
        %257 = sbr.rel (%p254) target = $region44
      $region43: #{transformation_net_forward.1} parent=5 // pred_region
        %s258 = ssub.s32 %s14, 1
        // Predicated region
        $region45: #{transformation_net_forward.1} parent=43 // pred_check
          %p259 = pneg %p117
        $region46: #{transformation_net_forward.1} parent=43 // pred_check_branch
          %261 = sbr.rel (%p259) target = $region48
        $region47: #{transformation_net_forward.1} parent=43 // pred_region
          %262 = dma.done [#allocation4], 4096
        $region48: #{transformation_net_forward.1} parent=43 // pred_fallthru
          _
        // Predicated region
        $region49: #{transformation_net_forward.1} parent=43 // pred_check
          %p263 = pneg %p138
        $region50: #{transformation_net_forward.1} parent=43 // pred_check_branch
          %265 = sbr.rel (%p263) target = $region52
        $region51: #{transformation_net_forward.1} parent=43 // pred_region
          %266 = dma.done [#allocation6], 16384
        $region52: #{transformation_net_forward.1} parent=43 // pred_fallthru
          _
        %s267 = smul.u32 2, %s24
        %p268 = scmp.lt.s32.totalorder %s23, 1
        %s269 = scalar_select %p268, %s23, 1
        %p270 = scmp.lt.s32.totalorder %s267, 1
        %s271 = scalar_select %p270, %s267, 1
        %s272 = smul.addr %s269, 2
        %s273 = sadd.s32 %s271, %s272
        %s274 = smul.addr %s273, 8
        %s275 = scalar_lea.vmem %s0, %s274
        %p276 = pneg %p54
        %p277 = pneg %p51
        %p278 = pneg %p75
        %p279 = pneg %p72
        %p280 = pneg %p96
        %p281 = pneg %p93
        %p282 = pneg %p117
        %p283 = pneg %p114
        %p284 = pneg %p138
        %p285 = pneg %p135
        %p286 = pneg %p159
        %p287 = pneg %p156
        %p288 = pneg %p185
        %p289 = pneg %p182
        %p290 = scmp.lt.s32.totalorder %s23, 1
        %s291 = scalar_select %p290, %s23, 1
        %s292 = scalar_lea.vmem %s6, %s291
        %s293 = smul.u32 2, %s24
        %p294 = scmp.lt.s32.totalorder %s23, 1
        %s295 = scalar_select %p294, %s23, 1
        %p296 = scmp.lt.s32.totalorder %s293, 1
        %s297 = scalar_select %p296, %s293, 1
        %s298 = smul.addr %s295, 2
        %s299 = sadd.s32 %s297, %s298
        %s300 = smul.addr %s299, 8
        %s301 = scalar_lea.vmem %s0, %s300
        %s302 = smul.u32 2, %s24
        %p303 = scmp.lt.s32.totalorder %s23, 1
        %s304 = scalar_select %p303, %s23, 1
        %s305 = scalar_lea.vmem %s6, %s304
        %p306 = scmp.eq.s32.totalorder %s24, 0
        // Predicated region
        $region53: #{transformation_net_forward.1} parent=43 // pred_check
          %p307 = pneg %p306
        $region54: #{transformation_net_forward.1} parent=43 // pred_check_branch
          %309 = sbr.rel (%p307) target = $region56
        $region55: #{transformation_net_forward.1} parent=43 // pred_region
          %v310 = vlaneseq
          %vm311 = vcmp.ge.s32.totalorder %v310, 0
          %vm312 = vcmp.lt.s32.totalorder %v310, 256
          %vm313 = vmand %vm311, %vm312
          %314 = vst.msk [vmem:[#allocation2] sm:$0x3] %vm313, -inf
        $region56: #{transformation_net_forward.1} parent=43 // pred_fallthru
          _
        %v315 = vld [vmem:[%s301] sm:$0xff]
        %v316 = vld [vmem:[%s301 + $0x8] sm:$0xff]
        %v317 = vld [vmem:[%s1] sm:$0xff]
        %v318 = vld [vmem:[%s5] sm:$0x1]
        %v320 = vlaneseq
        %v321 = vshrl.u32 %v320, 7
        %v322 = vsub.s32 0, %v321
        %v323 = vrot.slane %v318, %v322
        %vm325 = vcmask 64512
        %v327 = vsel %vm325, %v315, 0
        %v330 = vsel %vm325, %v316, 0
        %332 = vmatprep.subr.mxu0 0.0
        %333 = vmatpush1.msra.mxu0 %v317
        %334 = vmatprep.subr.mxu0 0.0
        %335 = vmatpush1.msra.mxu0 0.0
        %336 = vmatprep.subr.mxu0 0.0
        %337 = vmatpush1.msra.mxu0 0.0
        %338 = vmatprep.subr.mxu0 0.0
        %339 = vmatpush1.msra.mxu0 0.0
        %340 = vmatprep.subr.mxu0 0.0
        %341 = vmatpush1.msra.mxu0 0.0
        %342 = vmatprep.subr.mxu0 0.0
        %343 = vmatpush1.msra.mxu0 0.0
        %344 = vmatprep.subr.mxu0 0.0
        %345 = vmatpush1.msra.mxu0 0.0
        %346 = vmatprep.subr.mxu0 0.0
        %347 = vmatpush1.msra.mxu0 0.0
        %348 = vmatprep.subr.mxu0 0.0
        %349 = vmatpush1.msra.mxu0 0.0
        %350 = vmatprep.subr.mxu0 0.0
        %351 = vmatpush1.msra.mxu0 0.0
        %352 = vmatprep.subr.mxu0 0.0
        %353 = vmatpush1.msra.mxu0 0.0
        %354 = vmatprep.subr.mxu0 0.0
        %355 = vmatpush1.msra.mxu0 0.0
        %356 = vmatprep.subr.mxu0 0.0
        %357 = vmatpush1.msra.mxu0 0.0
        %358 = vmatprep.subr.mxu0 0.0
        %359 = vmatpush1.msra.mxu0 0.0
        %360 = vmatprep.subr.mxu0 0.0
        %361 = vmatpush1.msra.mxu0 0.0
        %362 = vmatprep.subr.mxu0 0.0
        %363 = vmatpush1.msra.mxu0 0.0
        %364 = vmatprep.subr.mxu0 0.0
        %365 = vmatpush1.msra.mxu0 0.0
        %366 = vmatprep.subr.mxu0 0.0
        %367 = vmatpush1.msra.mxu0 0.0
        %368 = vmatprep.subr.mxu0 0.0
        %369 = vmatpush1.msra.mxu0 0.0
        %370 = vmatprep.subr.mxu0 0.0
        %371 = vmatpush1.msra.mxu0 0.0
        %372 = vmatprep.subr.mxu0 0.0
        %373 = vmatpush1.msra.mxu0 0.0
        %374 = vmatprep.subr.mxu0 0.0
        %375 = vmatpush1.msra.mxu0 0.0
        %376 = vmatprep.subr.mxu0 0.0
        %377 = vmatpush1.msra.mxu0 0.0
        %378 = vmatprep.subr.mxu0 0.0
        %379 = vmatpush1.msra.mxu0 0.0
        %380 = vmatprep.subr.mxu0 0.0
        %381 = vmatpush1.msra.mxu0 0.0
        %382 = vmatprep.subr.mxu0 0.0
        %383 = vmatpush1.msra.mxu0 0.0
        %384 = vmatprep.subr.mxu0 0.0
        %385 = vmatpush1.msra.mxu0 0.0
        %386 = vmatprep.subr.mxu0 0.0
        %387 = vmatpush1.msra.mxu0 0.0
        %388 = vmatprep.subr.mxu0 0.0
        %389 = vmatpush1.msra.mxu0 0.0
        %390 = vmatprep.subr.mxu0 0.0
        %391 = vmatpush1.msra.mxu0 0.0
        %392 = vmatprep.subr.mxu0 0.0
        %393 = vmatpush1.msra.mxu0 0.0
        %394 = vmatprep.subr.mxu0 0.0
        %395 = vmatpush1.msra.mxu0 0.0
        %396 = vmatprep.mubr.f32.mxu0 0.0
        %397 = vmatmul.mubr.f32.gmra.mrb[0].mxu0 %v327
        %v398 = vpop.f32.mrb[0].mxu0
        %v399 = vadd.f32 %v323, %v398
        %v400 = vpop.f32.mrb[0].mxu0
        %401 = vmatprep.mubr.f32.mxu0 0.0
        %402 = vmatmul.mubr.f32.gmra.mrb[0].mxu0 %v330
        %v403 = vpop.f32.mrb[0].mxu0
        %v404 = vadd.f32 %v323, %v403
        %v405 = vpop.f32.mrb[0].mxu0
        %406 = vdwg.mxu0
        %v407 = vmax.f32 %v399, 0.0
        %v408 = vmax.f32 %v404, 0.0
        %v409 = vld [vmem:[%s2] sm:$0xff]
        %v410 = vld [vmem:[%s2 + $0x8] sm:$0xff]
        %v411 = vld [vmem:[%s2 + $0x10] sm:$0xff]
        %v412 = vld [vmem:[%s2 + $0x18] sm:$0xff]
        %v413 = vld [vmem:[%s2 + $0x20] sm:$0xff]
        %v414 = vld [vmem:[%s2 + $0x28] sm:$0xff]
        %v415 = vld [vmem:[%s2 + $0x30] sm:$0xff]
        %v416 = vld [vmem:[%s2 + $0x38] sm:$0xff]
        %v417 = vld [vmem:[%s5 + $0x1] sm:$0x1]
        %v419 = vlaneseq
        %v420 = vshrl.u32 %v419, 7
        %v421 = vsub.s32 0, %v420
        %v422 = vrot.slane %v417, %v421
        %vm424 = vcmask 523264
        %v426 = vsel %vm424, %v407, 0
        %v429 = vsel %vm424, %v408, 0
        %431 = vmatprep.subr.mxu0 0.0
        %432 = vmatpush1.msra.mxu0 %v409
        %433 = vmatprep.subr.mxu0 0.0
        %434 = vmatpush1.msra.mxu0 %v410
        %435 = vmatprep.subr.mxu0 0.0
        %436 = vmatpush1.msra.mxu0 %v411
        %437 = vmatprep.subr.mxu0 0.0
        %438 = vmatpush1.msra.mxu0 %v412
        %439 = vmatprep.subr.mxu0 0.0
        %440 = vmatpush1.msra.mxu0 %v413
        %441 = vmatprep.subr.mxu0 0.0
        %442 = vmatpush1.msra.mxu0 %v414
        %443 = vmatprep.subr.mxu0 0.0
        %444 = vmatpush1.msra.mxu0 %v415
        %445 = vmatprep.subr.mxu0 0.0
        %446 = vmatpush1.msra.mxu0 %v416
        %447 = vmatprep.subr.mxu0 0.0
        %448 = vmatpush1.msra.mxu0 0.0
        %449 = vmatprep.subr.mxu0 0.0
        %450 = vmatpush1.msra.mxu0 0.0
        %451 = vmatprep.subr.mxu0 0.0
        %452 = vmatpush1.msra.mxu0 0.0
        %453 = vmatprep.subr.mxu0 0.0
        %454 = vmatpush1.msra.mxu0 0.0
        %455 = vmatprep.subr.mxu0 0.0
        %456 = vmatpush1.msra.mxu0 0.0
        %457 = vmatprep.subr.mxu0 0.0
        %458 = vmatpush1.msra.mxu0 0.0
        %459 = vmatprep.subr.mxu0 0.0
        %460 = vmatpush1.msra.mxu0 0.0
        %461 = vmatprep.subr.mxu0 0.0
        %462 = vmatpush1.msra.mxu0 0.0
        %463 = vmatprep.subr.mxu0 0.0
        %464 = vmatpush1.msra.mxu0 0.0
        %465 = vmatprep.subr.mxu0 0.0
        %466 = vmatpush1.msra.mxu0 0.0
        %467 = vmatprep.subr.mxu0 0.0
        %468 = vmatpush1.msra.mxu0 0.0
        %469 = vmatprep.subr.mxu0 0.0
        %470 = vmatpush1.msra.mxu0 0.0
        %471 = vmatprep.subr.mxu0 0.0
        %472 = vmatpush1.msra.mxu0 0.0
        %473 = vmatprep.subr.mxu0 0.0
        %474 = vmatpush1.msra.mxu0 0.0
        %475 = vmatprep.subr.mxu0 0.0
        %476 = vmatpush1.msra.mxu0 0.0
        %477 = vmatprep.subr.mxu0 0.0
        %478 = vmatpush1.msra.mxu0 0.0
        %479 = vmatprep.subr.mxu0 0.0
        %480 = vmatpush1.msra.mxu0 0.0
        %481 = vmatprep.subr.mxu0 0.0
        %482 = vmatpush1.msra.mxu0 0.0
        %483 = vmatprep.subr.mxu0 0.0
        %484 = vmatpush1.msra.mxu0 0.0
        %485 = vmatprep.subr.mxu0 0.0
        %486 = vmatpush1.msra.mxu0 0.0
        %487 = vmatprep.subr.mxu0 0.0
        %488 = vmatpush1.msra.mxu0 0.0
        %489 = vmatprep.subr.mxu0 0.0
        %490 = vmatpush1.msra.mxu0 0.0
        %491 = vmatprep.subr.mxu0 0.0
        %492 = vmatpush1.msra.mxu0 0.0
        %493 = vmatprep.subr.mxu0 0.0
        %494 = vmatpush1.msra.mxu0 0.0
        %495 = vmatprep.mubr.f32.mxu0 0.0
        %496 = vmatmul.mubr.f32.gmra.mrb[0].mxu0 %v426
        %v497 = vpop.f32.mrb[0].mxu0
        %v498 = vadd.f32 %v422, %v497
        %v499 = vpop.f32.mrb[0].mxu0
        %500 = vmatprep.mubr.f32.mxu0 0.0
        %501 = vmatmul.mubr.f32.gmra.mrb[0].mxu0 %v429
        %v502 = vpop.f32.mrb[0].mxu0
        %v503 = vadd.f32 %v422, %v502
        %v504 = vpop.f32.mrb[0].mxu0
        %505 = vdwg.mxu0
        %v506 = vmax.f32 %v498, 0.0
        %v507 = vmax.f32 %v503, 0.0
        %v508 = vld [vmem:[#allocation3] sm:$0xff]
        %v509 = vld [vmem:[#allocation3 + $0x8] sm:$0xff]
        %v510 = vld [vmem:[#allocation3 + $0x10] sm:$0xff]
        %v511 = vld [vmem:[#allocation3 + $0x18] sm:$0xff]
        %v512 = vld [vmem:[#allocation3 + $0x20] sm:$0xff]
        %v513 = vld [vmem:[#allocation3 + $0x28] sm:$0xff]
        %v514 = vld [vmem:[#allocation3 + $0x30] sm:$0xff]
        %v515 = vld [vmem:[#allocation3 + $0x38] sm:$0xff]
        %v516 = vld [vmem:[#allocation3 + $0x40] sm:$0xff]
        %v517 = vld [vmem:[#allocation3 + $0x48] sm:$0xff]
        %v518 = vld [vmem:[#allocation3 + $0x50] sm:$0xff]
        %v519 = vld [vmem:[#allocation3 + $0x58] sm:$0xff]
        %v520 = vld [vmem:[#allocation3 + $0x60] sm:$0xff]
        %v521 = vld [vmem:[#allocation3 + $0x68] sm:$0xff]
        %v522 = vld [vmem:[#allocation3 + $0x70] sm:$0xff]
        %v523 = vld [vmem:[#allocation3 + $0x78] sm:$0xff]
        %v524 = vld [vmem:[#allocation3 + $0x80] sm:$0xff]
        %v525 = vld [vmem:[#allocation3 + $0x88] sm:$0xff]
        %v526 = vld [vmem:[#allocation3 + $0x90] sm:$0xff]
        %v527 = vld [vmem:[#allocation3 + $0x98] sm:$0xff]
        %v528 = vld [vmem:[#allocation3 + $0xa0] sm:$0xff]
        %v529 = vld [vmem:[#allocation3 + $0xa8] sm:$0xff]
        %v530 = vld [vmem:[#allocation3 + $0xb0] sm:$0xff]
        %v531 = vld [vmem:[#allocation3 + $0xb8] sm:$0xff]
        %v532 = vld [vmem:[#allocation3 + $0xc0] sm:$0xff]
        %v533 = vld [vmem:[#allocation3 + $0xc8] sm:$0xff]
        %v534 = vld [vmem:[#allocation3 + $0xd0] sm:$0xff]
        %v535 = vld [vmem:[#allocation3 + $0xd8] sm:$0xff]
        %v536 = vld [vmem:[#allocation3 + $0xe0] sm:$0xff]
        %v537 = vld [vmem:[#allocation3 + $0xe8] sm:$0xff]
        %v538 = vld [vmem:[#allocation3 + $0xf0] sm:$0xff]
        %v539 = vld [vmem:[#allocation3 + $0xf8] sm:$0xff]
        %v540 = vld [vmem:[%s5 + $0x2] sm:$0x3]
        %v542 = vlaneseq
        %v543 = vshrl.u32 %v542, 7
        %v544 = vsub.s32 0, %v543
        %v545 = vrot.slane %v540, %v544
        %v546 = vlaneseq
        %v547 = vshrl.u32 %v546, 7
        %v548 = vsub.s32 1, %v547
        %v549 = vrot.slane %v540, %v548
        %552 = vmatprep.subr.mxu0 %v509
        %553 = vmatpush1.msra.mxu0 %v508
        %554 = vmatprep.subr.mxu0 %v511
        %555 = vmatpush1.msra.mxu0 %v510
        %556 = vmatprep.subr.mxu0 %v513
        %557 = vmatpush1.msra.mxu0 %v512
        %558 = vmatprep.subr.mxu0 %v515
        %559 = vmatpush1.msra.mxu0 %v514
        %560 = vmatprep.subr.mxu0 %v517
        %561 = vmatpush1.msra.mxu0 %v516
        %562 = vmatprep.subr.mxu0 %v519
        %563 = vmatpush1.msra.mxu0 %v518
        %564 = vmatprep.subr.mxu0 %v521
        %565 = vmatpush1.msra.mxu0 %v520
        %566 = vmatprep.subr.mxu0 %v523
        %567 = vmatpush1.msra.mxu0 %v522
        %568 = vmatprep.subr.mxu0 %v525
        %569 = vmatpush1.msra.mxu0 %v524
        %570 = vmatprep.subr.mxu0 %v527
        %571 = vmatpush1.msra.mxu0 %v526
        %572 = vmatprep.subr.mxu0 %v529
        %573 = vmatpush1.msra.mxu0 %v528
        %574 = vmatprep.subr.mxu0 %v531
        %575 = vmatpush1.msra.mxu0 %v530
        %576 = vmatprep.subr.mxu0 %v533
        %577 = vmatpush1.msra.mxu0 %v532
        %578 = vmatprep.subr.mxu0 %v535
        %579 = vmatpush1.msra.mxu0 %v534
        %580 = vmatprep.subr.mxu0 %v537
        %581 = vmatpush1.msra.mxu0 %v536
        %582 = vmatprep.subr.mxu0 %v539
        %583 = vmatpush1.msra.mxu0 %v538
        %584 = vmatprep.subr.mxu0 0.0
        %585 = vmatpush1.msra.mxu0 0.0
        %586 = vmatprep.subr.mxu0 0.0
        %587 = vmatpush1.msra.mxu0 0.0
        %588 = vmatprep.subr.mxu0 0.0
        %589 = vmatpush1.msra.mxu0 0.0
        %590 = vmatprep.subr.mxu0 0.0
        %591 = vmatpush1.msra.mxu0 0.0
        %592 = vmatprep.subr.mxu0 0.0
        %593 = vmatpush1.msra.mxu0 0.0
        %594 = vmatprep.subr.mxu0 0.0
        %595 = vmatpush1.msra.mxu0 0.0
        %596 = vmatprep.subr.mxu0 0.0
        %597 = vmatpush1.msra.mxu0 0.0
        %598 = vmatprep.subr.mxu0 0.0
        %599 = vmatpush1.msra.mxu0 0.0
        %600 = vmatprep.subr.mxu0 0.0
        %601 = vmatpush1.msra.mxu0 0.0
        %602 = vmatprep.subr.mxu0 0.0
        %603 = vmatpush1.msra.mxu0 0.0
        %604 = vmatprep.subr.mxu0 0.0
        %605 = vmatpush1.msra.mxu0 0.0
        %606 = vmatprep.subr.mxu0 0.0
        %607 = vmatpush1.msra.mxu0 0.0
        %608 = vmatprep.subr.mxu0 0.0
        %609 = vmatpush1.msra.mxu0 0.0
        %610 = vmatprep.subr.mxu0 0.0
        %611 = vmatpush1.msra.mxu0 0.0
        %612 = vmatprep.subr.mxu0 0.0
        %613 = vmatpush1.msra.mxu0 0.0
        %614 = vmatprep.subr.mxu0 0.0
        %615 = vmatpush1.msra.mxu0 0.0
        %616 = vmatprep.mubr.f32.mxu0 0.0
        %617 = vmatmul.mubr.f32.gmra.mrb[0].mxu0 %v506
        %v618 = vpop.f32.mrb[0].mxu0
        %v619 = vadd.f32 %v545, %v618
        %v620 = vpop.f32.mrb[0].mxu0
        %v621 = vadd.f32 %v549, %v620
        %622 = vmatprep.mubr.f32.mxu0 0.0
        %623 = vmatmul.mubr.f32.gmra.mrb[0].mxu0 %v507
        %v624 = vpop.f32.mrb[0].mxu0
        %v625 = vadd.f32 %v545, %v624
        %v626 = vpop.f32.mrb[0].mxu0
        %v627 = vadd.f32 %v549, %v626
        %628 = vdwg.mxu0
        %v629 = vmax.f32 %v619, 0.0
        %v630 = vmax.f32 %v621, 0.0
        %v631 = vmax.f32 %v625, 0.0
        %v632 = vmax.f32 %v627, 0.0
        %v633 = vld [vmem:[#allocation2] sm:$0x3]
        %v634 = vmax.f32 %v629, %v631
        %v635 = vrot.slane %v634, 4
        %v636 = vmax.f32 %v634, %v635
        %v637 = vrot.slane %v636, 2
        %v638 = vmax.f32 %v636, %v637
        %v639 = vrot.slane %v638, 1
        %v640 = vmax.f32 %v638, %v639
        %v641 = vmax.f32 %v630, %v632
        %v642 = vrot.slane %v641, 4
        %v643 = vmax.f32 %v641, %v642
        %v644 = vrot.slane %v643, 2
        %v645 = vmax.f32 %v643, %v644
        %v646 = vrot.slane %v645, 1
        %v647 = vmax.f32 %v645, %v646
        %v650 = vcombine.low %v640, %v647
        %v652 = vunpack.c.l.s4 1966171168
        %v653 = vunpack.c.0.s8 %v652
        %v654 = vlaneseq
        %v655 = vshrl.u32 %v654, 7
        %v656 = vsub.s32 %v653, %v655
        %v657 = vrot.slane %v650, %v656
        %v659 = vunpack.c.l.s4 1966171168
        %v660 = vunpack.c.0.s8 %v659
        %v661 = vlaneseq
        %v662 = vshrl.u32 %v661, 7
        %v663 = vsub.s32 %v660, %v662
        %v664 = vrot.slane %v657, %v663
        %v666 = vmax.f32 %v633, %v664
        %v667 = vlaneseq
        %vm668 = vcmp.ge.s32.totalorder %v667, 0
        %vm669 = vcmp.lt.s32.totalorder %v667, 256
        %vm670 = vmand %vm668, %vm669
        %671 = vst.msk [vmem:[#allocation2] sm:$0x3] %vm670, %v666
        // Predicated region
        $region57: #{transformation_net_forward.1} parent=43 // pred_check
          %p672 = pneg %p306
        $region58: #{transformation_net_forward.1} parent=43 // pred_check_branch
          %674 = sbr.rel (%p672) target = $region60
        $region59: #{transformation_net_forward.1} parent=43 // pred_region
          %v675 = vld [vmem:[#allocation2] sm:$0x3]
          %v676 = vld [vmem:[#allocation5] sm:$0xff]
          %v677 = vld [vmem:[#allocation5 + $0x8] sm:$0xff]
          %v678 = vld [vmem:[#allocation5 + $0x20] sm:$0xff]
          %v679 = vld [vmem:[#allocation5 + $0x28] sm:$0xff]
          %v680 = vld [vmem:[#allocation5 + $0x40] sm:$0xff]
          %v681 = vld [vmem:[#allocation5 + $0x48] sm:$0xff]
          %v682 = vld [vmem:[#allocation5 + $0x60] sm:$0xff]
          %v683 = vld [vmem:[#allocation5 + $0x68] sm:$0xff]
          %v684 = vld [vmem:[#allocation5 + $0x80] sm:$0xff]
          %v685 = vld [vmem:[#allocation5 + $0x88] sm:$0xff]
          %v686 = vld [vmem:[#allocation5 + $0xa0] sm:$0xff]
          %v687 = vld [vmem:[#allocation5 + $0xa8] sm:$0xff]
          %v688 = vld [vmem:[#allocation5 + $0xc0] sm:$0xff]
          %v689 = vld [vmem:[#allocation5 + $0xc8] sm:$0xff]
          %v690 = vld [vmem:[#allocation5 + $0xe0] sm:$0xff]
          %v691 = vld [vmem:[#allocation5 + $0xe8] sm:$0xff]
          %v692 = vld [vmem:[#allocation5 + $0x100] sm:$0xff]
          %v693 = vld [vmem:[#allocation5 + $0x108] sm:$0xff]
          %v694 = vld [vmem:[#allocation5 + $0x120] sm:$0xff]
          %v695 = vld [vmem:[#allocation5 + $0x128] sm:$0xff]
          %v696 = vld [vmem:[#allocation5 + $0x140] sm:$0xff]
          %v697 = vld [vmem:[#allocation5 + $0x148] sm:$0xff]
          %v698 = vld [vmem:[#allocation5 + $0x160] sm:$0xff]
          %v699 = vld [vmem:[#allocation5 + $0x168] sm:$0xff]
          %v700 = vld [vmem:[#allocation5 + $0x180] sm:$0xff]
          %v701 = vld [vmem:[#allocation5 + $0x188] sm:$0xff]
          %v702 = vld [vmem:[#allocation5 + $0x1a0] sm:$0xff]
          %v703 = vld [vmem:[#allocation5 + $0x1a8] sm:$0xff]
          %v704 = vld [vmem:[#allocation5 + $0x1c0] sm:$0xff]
          %v705 = vld [vmem:[#allocation5 + $0x1c8] sm:$0xff]
          %v706 = vld [vmem:[#allocation5 + $0x1e0] sm:$0xff]
          %v707 = vld [vmem:[#allocation5 + $0x1e8] sm:$0xff]
          %v708 = vld [vmem:[#allocation5 + $0x200] sm:$0xff]
          %v709 = vld [vmem:[#allocation5 + $0x208] sm:$0xff]
          %v710 = vld [vmem:[#allocation5 + $0x220] sm:$0xff]
          %v711 = vld [vmem:[#allocation5 + $0x228] sm:$0xff]
          %v712 = vld [vmem:[#allocation5 + $0x240] sm:$0xff]
          %v713 = vld [vmem:[#allocation5 + $0x248] sm:$0xff]
          %v714 = vld [vmem:[#allocation5 + $0x260] sm:$0xff]
          %v715 = vld [vmem:[#allocation5 + $0x268] sm:$0xff]
          %v716 = vld [vmem:[#allocation5 + $0x280] sm:$0xff]
          %v717 = vld [vmem:[#allocation5 + $0x288] sm:$0xff]
          %v718 = vld [vmem:[#allocation5 + $0x2a0] sm:$0xff]
          %v719 = vld [vmem:[#allocation5 + $0x2a8] sm:$0xff]
          %v720 = vld [vmem:[#allocation5 + $0x2c0] sm:$0xff]
          %v721 = vld [vmem:[#allocation5 + $0x2c8] sm:$0xff]
          %v722 = vld [vmem:[#allocation5 + $0x2e0] sm:$0xff]
          %v723 = vld [vmem:[#allocation5 + $0x2e8] sm:$0xff]
          %v724 = vld [vmem:[#allocation5 + $0x300] sm:$0xff]
          %v725 = vld [vmem:[#allocation5 + $0x308] sm:$0xff]
          %v726 = vld [vmem:[#allocation5 + $0x320] sm:$0xff]
          %v727 = vld [vmem:[#allocation5 + $0x328] sm:$0xff]
          %v728 = vld [vmem:[#allocation5 + $0x340] sm:$0xff]
          %v729 = vld [vmem:[#allocation5 + $0x348] sm:$0xff]
          %v730 = vld [vmem:[#allocation5 + $0x360] sm:$0xff]
          %v731 = vld [vmem:[#allocation5 + $0x368] sm:$0xff]
          %v732 = vld [vmem:[#allocation5 + $0x380] sm:$0xff]
          %v733 = vld [vmem:[#allocation5 + $0x388] sm:$0xff]
          %v734 = vld [vmem:[#allocation5 + $0x3a0] sm:$0xff]
          %v735 = vld [vmem:[#allocation5 + $0x3a8] sm:$0xff]
          %v736 = vld [vmem:[#allocation5 + $0x3c0] sm:$0xff]
          %v737 = vld [vmem:[#allocation5 + $0x3c8] sm:$0xff]
          %v738 = vld [vmem:[#allocation5 + $0x3e0] sm:$0xff]
          %v739 = vld [vmem:[#allocation5 + $0x3e8] sm:$0xff]
          %v740 = vld [vmem:[%s5 + $0x4] sm:$0x3]
          %v742 = vlaneseq
          %v743 = vshrl.u32 %v742, 7
          %v744 = vsub.s32 0, %v743
          %v745 = vrot.slane %v675, %v744
          %v746 = vlaneseq
          %v747 = vshrl.u32 %v746, 7
          %v748 = vsub.s32 1, %v747
          %v749 = vrot.slane %v675, %v748
          %v753 = vlaneseq
          %v754 = vshrl.u32 %v753, 7
          %v755 = vsub.s32 0, %v754
          %v756 = vrot.slane %v740, %v755
          %v757 = vlaneseq
          %v758 = vshrl.u32 %v757, 7
          %v759 = vsub.s32 1, %v758
          %v760 = vrot.slane %v740, %v759
          %763 = vmatprep.subr.mxu0 %v677
          %764 = vmatpush1.msra.mxu0 %v676
          %765 = vmatprep.subr.mxu0 %v679
          %766 = vmatpush1.msra.mxu0 %v678
          %767 = vmatprep.subr.mxu0 %v681
          %768 = vmatpush1.msra.mxu0 %v680
          %769 = vmatprep.subr.mxu0 %v683
          %770 = vmatpush1.msra.mxu0 %v682
          %771 = vmatprep.subr.mxu0 %v685
          %772 = vmatpush1.msra.mxu0 %v684
          %773 = vmatprep.subr.mxu0 %v687
          %774 = vmatpush1.msra.mxu0 %v686
          %775 = vmatprep.subr.mxu0 %v689
          %776 = vmatpush1.msra.mxu0 %v688
          %777 = vmatprep.subr.mxu0 %v691
          %778 = vmatpush1.msra.mxu0 %v690
          %779 = vmatprep.subr.mxu0 %v693
          %780 = vmatpush1.msra.mxu0 %v692
          %781 = vmatprep.subr.mxu0 %v695
          %782 = vmatpush1.msra.mxu0 %v694
          %783 = vmatprep.subr.mxu0 %v697
          %784 = vmatpush1.msra.mxu0 %v696
          %785 = vmatprep.subr.mxu0 %v699
          %786 = vmatpush1.msra.mxu0 %v698
          %787 = vmatprep.subr.mxu0 %v701
          %788 = vmatpush1.msra.mxu0 %v700
          %789 = vmatprep.subr.mxu0 %v703
          %790 = vmatpush1.msra.mxu0 %v702
          %791 = vmatprep.subr.mxu0 %v705
          %792 = vmatpush1.msra.mxu0 %v704
          %793 = vmatprep.subr.mxu0 %v707
          %794 = vmatpush1.msra.mxu0 %v706
          %795 = vmatprep.subr.mxu0 %v709
          %796 = vmatpush1.msra.mxu0 %v708
          %797 = vmatprep.subr.mxu0 %v711
          %798 = vmatpush1.msra.mxu0 %v710
          %799 = vmatprep.subr.mxu0 %v713
          %800 = vmatpush1.msra.mxu0 %v712
          %801 = vmatprep.subr.mxu0 %v715
          %802 = vmatpush1.msra.mxu0 %v714
          %803 = vmatprep.subr.mxu0 %v717
          %804 = vmatpush1.msra.mxu0 %v716
          %805 = vmatprep.subr.mxu0 %v719
          %806 = vmatpush1.msra.mxu0 %v718
          %807 = vmatprep.subr.mxu0 %v721
          %808 = vmatpush1.msra.mxu0 %v720
          %809 = vmatprep.subr.mxu0 %v723
          %810 = vmatpush1.msra.mxu0 %v722
          %811 = vmatprep.subr.mxu0 %v725
          %812 = vmatpush1.msra.mxu0 %v724
          %813 = vmatprep.subr.mxu0 %v727
          %814 = vmatpush1.msra.mxu0 %v726
          %815 = vmatprep.subr.mxu0 %v729
          %816 = vmatpush1.msra.mxu0 %v728
          %817 = vmatprep.subr.mxu0 %v731
          %818 = vmatpush1.msra.mxu0 %v730
          %819 = vmatprep.subr.mxu0 %v733
          %820 = vmatpush1.msra.mxu0 %v732
          %821 = vmatprep.subr.mxu0 %v735
          %822 = vmatpush1.msra.mxu0 %v734
          %823 = vmatprep.subr.mxu0 %v737
          %824 = vmatpush1.msra.mxu0 %v736
          %825 = vmatprep.subr.mxu0 %v739
          %826 = vmatpush1.msra.mxu0 %v738
          %827 = vmatprep.mubr.f32.mxu0 %v749
          %828 = vmatmul.mubr.f32.gmra.mrb[0].mxu0 %v745
          %v829 = vpop.f32.mrb[0].mxu0
          %v830 = vadd.f32 %v756, %v829
          %v831 = vpop.f32.mrb[0].mxu0
          %v832 = vadd.f32 %v760, %v831
          %833 = vdwg.mxu0
          %v834 = vmax.f32 %v830, 0.0
          %v835 = vmax.f32 %v832, 0.0
          %v836 = vld [vmem:[#allocation5 + $0x10] sm:$0xff]
          %v837 = vld [vmem:[#allocation5 + $0x30] sm:$0xff]
          %v838 = vld [vmem:[#allocation5 + $0x50] sm:$0xff]
          %v839 = vld [vmem:[#allocation5 + $0x70] sm:$0xff]
          %v840 = vld [vmem:[#allocation5 + $0x90] sm:$0xff]
          %v841 = vld [vmem:[#allocation5 + $0xb0] sm:$0xff]
          %v842 = vld [vmem:[#allocation5 + $0xd0] sm:$0xff]
          %v843 = vld [vmem:[#allocation5 + $0xf0] sm:$0xff]
          %v844 = vld [vmem:[#allocation5 + $0x110] sm:$0xff]
          %v845 = vld [vmem:[#allocation5 + $0x130] sm:$0xff]
          %v846 = vld [vmem:[#allocation5 + $0x150] sm:$0xff]
          %v847 = vld [vmem:[#allocation5 + $0x170] sm:$0xff]
          %v848 = vld [vmem:[#allocation5 + $0x190] sm:$0xff]
          %v849 = vld [vmem:[#allocation5 + $0x1b0] sm:$0xff]
          %v850 = vld [vmem:[#allocation5 + $0x1d0] sm:$0xff]
          %v851 = vld [vmem:[#allocation5 + $0x1f0] sm:$0xff]
          %v852 = vld [vmem:[#allocation5 + $0x210] sm:$0xff]
          %v853 = vld [vmem:[#allocation5 + $0x230] sm:$0xff]
          %v854 = vld [vmem:[#allocation5 + $0x250] sm:$0xff]
          %v855 = vld [vmem:[#allocation5 + $0x270] sm:$0xff]
          %v856 = vld [vmem:[#allocation5 + $0x290] sm:$0xff]
          %v857 = vld [vmem:[#allocation5 + $0x2b0] sm:$0xff]
          %v858 = vld [vmem:[#allocation5 + $0x2d0] sm:$0xff]
          %v859 = vld [vmem:[#allocation5 + $0x2f0] sm:$0xff]
          %v860 = vld [vmem:[#allocation5 + $0x310] sm:$0xff]
          %v861 = vld [vmem:[#allocation5 + $0x330] sm:$0xff]
          %v862 = vld [vmem:[#allocation5 + $0x350] sm:$0xff]
          %v863 = vld [vmem:[#allocation5 + $0x370] sm:$0xff]
          %v864 = vld [vmem:[#allocation5 + $0x390] sm:$0xff]
          %v865 = vld [vmem:[#allocation5 + $0x3b0] sm:$0xff]
          %v866 = vld [vmem:[#allocation5 + $0x3d0] sm:$0xff]
          %v867 = vld [vmem:[#allocation5 + $0x3f0] sm:$0xff]
          %v868 = vld [vmem:[%s5 + $0x6] sm:$0x1]
          %869 = vmatprep.subr.mxu0 0.0
          %870 = vmatpush1.msra.mxu0 %v836
          %871 = vmatprep.subr.mxu0 0.0
          %872 = vmatpush1.msra.mxu0 %v837
          %873 = vmatprep.subr.mxu0 0.0
          %874 = vmatpush1.msra.mxu0 %v838
          %875 = vmatprep.subr.mxu0 0.0
          %876 = vmatpush1.msra.mxu0 %v839
          %877 = vmatprep.subr.mxu0 0.0
          %878 = vmatpush1.msra.mxu0 %v840
          %879 = vmatprep.subr.mxu0 0.0
          %880 = vmatpush1.msra.mxu0 %v841
          %881 = vmatprep.subr.mxu0 0.0
          %882 = vmatpush1.msra.mxu0 %v842
          %883 = vmatprep.subr.mxu0 0.0
          %884 = vmatpush1.msra.mxu0 %v843
          %885 = vmatprep.subr.mxu0 0.0
          %886 = vmatpush1.msra.mxu0 %v844
          %887 = vmatprep.subr.mxu0 0.0
          %888 = vmatpush1.msra.mxu0 %v845
          %889 = vmatprep.subr.mxu0 0.0
          %890 = vmatpush1.msra.mxu0 %v846
          %891 = vmatprep.subr.mxu0 0.0
          %892 = vmatpush1.msra.mxu0 %v847
          %893 = vmatprep.subr.mxu0 0.0
          %894 = vmatpush1.msra.mxu0 %v848
          %895 = vmatprep.subr.mxu0 0.0
          %896 = vmatpush1.msra.mxu0 %v849
          %897 = vmatprep.subr.mxu0 0.0
          %898 = vmatpush1.msra.mxu0 %v850
          %899 = vmatprep.subr.mxu0 0.0
          %900 = vmatpush1.msra.mxu0 %v851
          %901 = vmatprep.subr.mxu0 0.0
          %902 = vmatpush1.msra.mxu0 %v852
          %903 = vmatprep.subr.mxu0 0.0
          %904 = vmatpush1.msra.mxu0 %v853
          %905 = vmatprep.subr.mxu0 0.0
          %906 = vmatpush1.msra.mxu0 %v854
          %907 = vmatprep.subr.mxu0 0.0
          %908 = vmatpush1.msra.mxu0 %v855
          %909 = vmatprep.subr.mxu0 0.0
          %910 = vmatpush1.msra.mxu0 %v856
          %911 = vmatprep.subr.mxu0 0.0
          %912 = vmatpush1.msra.mxu0 %v857
          %913 = vmatprep.subr.mxu0 0.0
          %914 = vmatpush1.msra.mxu0 %v858
          %915 = vmatprep.subr.mxu0 0.0
          %916 = vmatpush1.msra.mxu0 %v859
          %917 = vmatprep.subr.mxu0 0.0
          %918 = vmatpush1.msra.mxu0 %v860
          %919 = vmatprep.subr.mxu0 0.0
          %920 = vmatpush1.msra.mxu0 %v861
          %921 = vmatprep.subr.mxu0 0.0
          %922 = vmatpush1.msra.mxu0 %v862
          %923 = vmatprep.subr.mxu0 0.0
          %924 = vmatpush1.msra.mxu0 %v863
          %925 = vmatprep.subr.mxu0 0.0
          %926 = vmatpush1.msra.mxu0 %v864
          %927 = vmatprep.subr.mxu0 0.0
          %928 = vmatpush1.msra.mxu0 %v865
          %929 = vmatprep.subr.mxu0 0.0
          %930 = vmatpush1.msra.mxu0 %v866
          %931 = vmatprep.subr.mxu0 0.0
          %932 = vmatpush1.msra.mxu0 %v867
          %933 = vmatprep.mubr.f32.mxu0 %v835
          %934 = vmatmul.mubr.f32.gmra.mrb[0].mxu0 %v834
          %v935 = vpop.f32.mrb[0].mxu0
          %v936 = vadd.f32 %v868, %v935
          %v937 = vpop.f32.mrb[0].mxu0
          %938 = vdwg.mxu0
          %v939 = vmax.f32 %v936, 0.0
          %v940 = vld [vmem:[#allocation5 + $0x18] sm:$0xff]
          %v941 = vld [vmem:[#allocation5 + $0x38] sm:$0xff]
          %v942 = vld [vmem:[#allocation5 + $0x58] sm:$0xff]
          %v943 = vld [vmem:[#allocation5 + $0x78] sm:$0xff]
          %v944 = vld [vmem:[#allocation5 + $0x98] sm:$0xff]
          %v945 = vld [vmem:[#allocation5 + $0xb8] sm:$0xff]
          %v946 = vld [vmem:[#allocation5 + $0xd8] sm:$0xff]
          %v947 = vld [vmem:[#allocation5 + $0xf8] sm:$0xff]
          %v948 = vld [vmem:[#allocation5 + $0x118] sm:$0xff]
          %v949 = vld [vmem:[#allocation5 + $0x138] sm:$0xff]
          %v950 = vld [vmem:[#allocation5 + $0x158] sm:$0xff]
          %v951 = vld [vmem:[#allocation5 + $0x178] sm:$0xff]
          %v952 = vld [vmem:[#allocation5 + $0x198] sm:$0xff]
          %v953 = vld [vmem:[#allocation5 + $0x1b8] sm:$0xff]
          %v954 = vld [vmem:[#allocation5 + $0x1d8] sm:$0xff]
          %v955 = vld [vmem:[#allocation5 + $0x1f8] sm:$0xff]
          %v956 = vld [vmem:[%s5 + $0x7] sm:$0x1]
          %957 = vmatprep.subr.mxu0 0.0
          %958 = vmatpush1.msra.mxu0 %v940
          %959 = vmatprep.subr.mxu0 0.0
          %960 = vmatpush1.msra.mxu0 %v941
          %961 = vmatprep.subr.mxu0 0.0
          %962 = vmatpush1.msra.mxu0 %v942
          %963 = vmatprep.subr.mxu0 0.0
          %964 = vmatpush1.msra.mxu0 %v943
          %965 = vmatprep.subr.mxu0 0.0
          %966 = vmatpush1.msra.mxu0 %v944
          %967 = vmatprep.subr.mxu0 0.0
          %968 = vmatpush1.msra.mxu0 %v945
          %969 = vmatprep.subr.mxu0 0.0
          %970 = vmatpush1.msra.mxu0 %v946
          %971 = vmatprep.subr.mxu0 0.0
          %972 = vmatpush1.msra.mxu0 %v947
          %973 = vmatprep.subr.mxu0 0.0
          %974 = vmatpush1.msra.mxu0 %v948
          %975 = vmatprep.subr.mxu0 0.0
          %976 = vmatpush1.msra.mxu0 %v949
          %977 = vmatprep.subr.mxu0 0.0
          %978 = vmatpush1.msra.mxu0 %v950
          %979 = vmatprep.subr.mxu0 0.0
          %980 = vmatpush1.msra.mxu0 %v951
          %981 = vmatprep.subr.mxu0 0.0
          %982 = vmatpush1.msra.mxu0 %v952
          %983 = vmatprep.subr.mxu0 0.0
          %984 = vmatpush1.msra.mxu0 %v953
          %985 = vmatprep.subr.mxu0 0.0
          %986 = vmatpush1.msra.mxu0 %v954
          %987 = vmatprep.subr.mxu0 0.0
          %988 = vmatpush1.msra.mxu0 %v955
          %989 = vmatprep.subr.mxu0 0.0
          %990 = vmatpush1.msra.mxu0 0.0
          %991 = vmatprep.subr.mxu0 0.0
          %992 = vmatpush1.msra.mxu0 0.0
          %993 = vmatprep.subr.mxu0 0.0
          %994 = vmatpush1.msra.mxu0 0.0
          %995 = vmatprep.subr.mxu0 0.0
          %996 = vmatpush1.msra.mxu0 0.0
          %997 = vmatprep.subr.mxu0 0.0
          %998 = vmatpush1.msra.mxu0 0.0
          %999 = vmatprep.subr.mxu0 0.0
          %1000 = vmatpush1.msra.mxu0 0.0
          %1001 = vmatprep.subr.mxu0 0.0
          %1002 = vmatpush1.msra.mxu0 0.0
          %1003 = vmatprep.subr.mxu0 0.0
          %1004 = vmatpush1.msra.mxu0 0.0
          %1005 = vmatprep.subr.mxu0 0.0
          %1006 = vmatpush1.msra.mxu0 0.0
          %1007 = vmatprep.subr.mxu0 0.0
          %1008 = vmatpush1.msra.mxu0 0.0
          %1009 = vmatprep.subr.mxu0 0.0
          %1010 = vmatpush1.msra.mxu0 0.0
          %1011 = vmatprep.subr.mxu0 0.0
          %1012 = vmatpush1.msra.mxu0 0.0
          %1013 = vmatprep.subr.mxu0 0.0
          %1014 = vmatpush1.msra.mxu0 0.0
          %1015 = vmatprep.subr.mxu0 0.0
          %1016 = vmatpush1.msra.mxu0 0.0
          %1017 = vmatprep.subr.mxu0 0.0
          %1018 = vmatpush1.msra.mxu0 0.0
          %1019 = vmatprep.subr.mxu0 0.0
          %1020 = vmatpush1.msra.mxu0 0.0
          %1021 = vmatprep.mubr.f32.mxu0 0.0
          %1022 = vmatmul.mubr.f32.gmra.mrb[0].mxu0 %v939
          %v1023 = vpop.f32.mrb[0].mxu0
          %v1024 = vadd.f32 %v956, %v1023
          %v1025 = vpop.f32.mrb[0].mxu0
          %1026 = vdwg.mxu0
          %1027 = vst [vmem:[%s305] sm:$0x1] %v1024
        $region60: #{transformation_net_forward.1} parent=43 // pred_fallthru
          _
        %p1028 = scmp.lt.s32.totalorder %s23, 1
        %s1029 = scalar_select %p1028, %s23, 1
        %s1030 = scalar_lea.vmem %s6, %s1029
        // Predicated region
        $region61: #{transformation_net_forward.1} parent=43 // pred_check
          %p1031 = pneg %p182
        $region62: #{transformation_net_forward.1} parent=43 // pred_check_branch
          %1033 = sbr.rel (%p1031) target = $region64
        $region63: #{transformation_net_forward.1} parent=43 // pred_region
          _
        $region64: #{transformation_net_forward.1} parent=43 // pred_fallthru
          _
      $region44: #{transformation_net_forward.1} parent=5 // pred_fallthru
        _
      %p1034 = scmp.le.s32.totalorder 2, %s14
      // Predicated region
      $region65: #{transformation_net_forward.1} parent=5 // pred_check
        %p1035 = pneg %p1034
      $region66: #{transformation_net_forward.1} parent=5 // pred_check_branch
        %1037 = sbr.rel (%p1035) target = $region68
      $region67: #{transformation_net_forward.1} parent=5 // pred_region
        %s1038 = ssub.s32 %s14, 2
        // Predicated region
        $region69: #{transformation_net_forward.1} parent=67 // pred_check
          %p1039 = pneg %p188
        $region70: #{transformation_net_forward.1} parent=67 // pred_check_branch
          %1041 = sbr.rel (%p1039) target = $region72
        $region71: #{transformation_net_forward.1} parent=67 // pred_region
          %p1042 = scmp.lt.s32.totalorder %s25, 1
          %s1043 = scalar_select %p1042, %s25, 1
          %s1044 = scalar_lea.vmem %s6, %s1043
        $region72: #{transformation_net_forward.1} parent=67 // pred_fallthru
          _
      $region68: #{transformation_net_forward.1} parent=5 // pred_fallthru
        _
    $region6: #{transformation_net_forward.1} parent=1 // loop_footer
      %s18 = sadd.s32 1, %s14
    $region7: #{transformation_net_forward.1} parent=1 // loop_footer_branch
      %13 = sbr.rel target = $region3
    $region8: #{transformation_net_forward.1} parent=1 // loop_exit
      _
    %1045 = vsyncpa [#allocation4], 1
    %s1046 = scalar_lea.sflag [#allocation4], 1
    %1047 = vsyncpa %s1046, 1
    %1048 = vsyncpa [#allocation6], 1

</llo_original>
